<compile_context>
chip_gen: v6e
topology: v6e:2x2x1
jax: 0.10.0
libtpu: 0.0.40
codegen_flags: <defaults>
</compile_context>

<pallas_src>
import jax
import jax.numpy as jnp
from jax.experimental import pallas as pl
from jax.experimental.pallas import tpu as pltpu

# ---------------- problem sizes (small, synthetic) ----------------
SEQ = 8                      # max sequence length after tokenization
HID = 32                     # transformer hidden size (768 in the real model)
META = 16                    # metadata encoding size
N_EVID = 4                   # number of evidence snippets
N_LABELS_ALL = 8             # total number of labels across domains
N_LABELS_DOM = 3             # labels belonging to `domain`
RANK_HID = 16                # hidden size of the evidence ranker MLP
INST_DIM = 2 * HID + META    # concat(claim, evidence, metadata) = 80
LABEL_LANES = 128            # lane-padded label block inside the fused weight
W_COLS = LABEL_LANES + RANK_HID   # fused projection width = 144
OUT_LANES = 128              # lane-dense output slab width
NEG_BIG = -1e30              # softmax mask for padded label lanes

DOMAIN_LABEL_IDX = jnp.array([1, 4, 6], dtype=jnp.int32)   # labelMaskDomain

_VMEM = pl.BlockSpec(memory_space=pltpu.MemorySpace.VMEM)


# ---------------- single fused kernel ----------------
def _fused_kernel(tok_ref, pmask_ref, meta_ref, wslab_ref, w2b2_ref, out_ref):
    # ---- ONE block-diagonal pooling matmul (pre-normalized masks) ----
    # pmask rows: [claim; evid_0..E-1], already scaled by 1/token_count.
    pooled = jnp.dot(pmask_ref[...], tok_ref[...],
                     preferred_element_type=jnp.float32)          # [1+E, H]
    claim_enc = pooled[0:1, :]                                     # [1, H]
    evid_enc = pooled[1:1 + N_EVID, :]                             # [E, H]

    # ---- column-fused instance projection -----------------------------
    # wslab rows: [0:H) claim block, [H:2H) evidence block, [2H:INST_DIM)
    # metadata block, row INST_DIM = fused bias.  Columns: [0:128) label
    # embedding (real labels 0..L-1, padded lanes zero weight / -1e30 bias),
    # [128:144) ranker layer-1.
    w_claim = wslab_ref[0:HID, :]                                  # [H, 144]
    w_evid = wslab_ref[HID:2 * HID, :]                             # [H, 144]
    w_meta = wslab_ref[2 * HID:INST_DIM, :]                        # [META, 144]
    bias = wslab_ref[INST_DIM:INST_DIM + 1, :]                     # [1, 144]

    const = (jnp.dot(claim_enc, w_claim, preferred_element_type=jnp.float32)
             + jnp.dot(meta_ref[...], w_meta,
                       preferred_element_type=jnp.float32)
             + bias)                                               # [1, 144]
    proj = jnp.dot(evid_enc, w_evid,
                   preferred_element_type=jnp.float32) + const     # [E, 144]

    logits = proj[:, 0:LABEL_LANES]                                # [E, 128]
    h = jnp.maximum(proj[:, LABEL_LANES:], 0.0)                    # [E, RH]

    # ---- evidenceRanker layer 2: VPU multiply + XLU lane reduce + sigmoid ----
    w2 = w2b2_ref[:, 0:RANK_HID]                                   # [1, RH]
    b2 = w2b2_ref[:, RANK_HID:RANK_HID + 1]                        # [1, 1]
    rank_logit = jnp.sum(h * w2, axis=-1, keepdims=True) + b2      # [E, 1]
    rank = 1.0 / (1.0 + jnp.exp(-rank_logit))                      # exact sigmoid

    # ---- labelEmbedding softmax over lane-padded labels ----
    # Padded lanes carry logit == -1e30 -> exp == 0, so the softmax is exactly
    # the softmax over the N_LABELS_ALL real labels.
    mx = jnp.max(logits, axis=-1, keepdims=True)
    ex = jnp.exp(logits - mx)
    probs = ex * pl.reciprocal(jnp.sum(ex, axis=-1, keepdims=True), approx=True)

    # ---- rank-weighted accumulation over evidences (sublane reduce) ----
    dist = jnp.sum(rank * probs, axis=0, keepdims=True)            # [1, 128]

    # lane/sublane-dense store; wrapper gathers the domain labels.
    out_ref[...] = jnp.broadcast_to(dist, out_ref.shape)


# ---------------- wrapper-side packing helpers ----------------
def _build_pool_mask(claim_mask, evid_masks):
    """Block-diagonal pooling mask, pre-normalized by 1/token_count."""
    masks = jnp.concatenate([claim_mask, evid_masks], axis=0)       # [1+E, S]
    norm = masks / jnp.maximum(jnp.sum(masks, axis=1, keepdims=True), 1e-9)
    n = norm.shape[0]
    eye = jnp.eye(n, dtype=norm.dtype)                              # [1+E, 1+E]
    return (eye[:, :, None] * norm[None, :, :]).reshape(n, n * SEQ)


def pack_params(params):
    """Build the kernel-side fused weight slab and ranker-layer-2 row."""
    w_fused = jnp.zeros((INST_DIM, W_COLS), jnp.float32)
    w_fused = w_fused.at[:, :N_LABELS_ALL].set(params['wl'])
    w_fused = w_fused.at[:, LABEL_LANES:].set(params['w1'])

    bias_fused = jnp.zeros((1, W_COLS), jnp.float32)
    bias_fused = bias_fused.at[:, :N_LABELS_ALL].set(params['bl'])
    bias_fused = bias_fused.at[:, N_LABELS_ALL:LABEL_LANES].set(NEG_BIG)
    bias_fused = bias_fused.at[:, LABEL_LANES:].set(params['b1'])

    params = dict(params)
    params['wslab'] = jnp.concatenate([w_fused, bias_fused], axis=0)  # [81, 144]
    params['w2b2'] = jnp.concatenate([params['w2'].T, params['b2']],
                                     axis=1)                          # [1, 17]
    return params


def verification_forward(claim_tokens, claim_mask, evid_tokens, evid_masks,
                         metadata_encoding, params):
    # Wrapper-side work is pure layout plumbing (+ the 1/len normalization).
    tokens_all = jnp.concatenate(
        [claim_tokens.reshape(SEQ, HID),
         evid_tokens.reshape(N_EVID * SEQ, HID)], axis=0)           # [(1+E)S, H]
    pool_mask = _build_pool_mask(claim_mask, evid_masks)            # [1+E,(1+E)S]
    meta = metadata_encoding.reshape(1, META)

    out = pl.pallas_call(
        _fused_kernel,
        out_shape=jax.ShapeDtypeStruct((8, OUT_LANES), jnp.float32),
        in_specs=[_VMEM] * 5,
        out_specs=_VMEM,
    )(tokens_all, pool_mask, meta, params['wslab'], params['w2b2'])

    # labelMaskDomain: 3-element gather of the domain's labels.
    return out[0, DOMAIN_LABEL_IDX]                                  # [nD]


# ---------------- pure-JAX reference for validation ----------------
def reference_forward(claim_tokens, claim_mask, evid_tokens, evid_masks,
                      metadata_encoding, params):
    def pool(emb, mask):
        m = mask[:, :, None]
        return jnp.sum(emb * m, axis=1) / jnp.maximum(jnp.sum(m, axis=1), 1e-9)

    claim_enc = pool(claim_tokens, claim_mask)[0]
    evid_enc = pool(evid_tokens, evid_masks)
    dist = jnp.zeros((N_LABELS_DOM,), jnp.float32)
    for i in range(evid_enc.shape[0]):
        inst = jnp.concatenate([claim_enc, evid_enc[i], metadata_encoding])
        h = jnp.maximum(inst @ params['w1'] + params['b1'][0], 0.0)
        rank = jax.nn.sigmoid(h @ params['w2'] + params['b2'][0])[0]
        probs = jax.nn.softmax(inst @ params['wl'] + params['bl'][0])
        dom = probs @ params['sel']
        dist = dist + rank * dom
    return dist


if __name__ == "__main__":
    key = jax.random.PRNGKey(0)
    ks = jax.random.split(key, 10)

    # simulated transformer token-level outputs + attention masks
    claim_tokens = jax.random.normal(ks[0], (1, SEQ, HID), jnp.float32)
    claim_mask = (jnp.arange(SEQ) < 6).astype(jnp.float32)[None, :]
    evid_tokens = jax.random.normal(ks[1], (N_EVID, SEQ, HID), jnp.float32)
    lens = jnp.array([8, 5, 3, 7])
    evid_masks = (jnp.arange(SEQ)[None, :] < lens[:, None]).astype(jnp.float32)
    metadata_encoding = jax.random.normal(ks[2], (META,), jnp.float32)

    # deterministic synthetic parameters (weights stored as [in, out])
    sel = jax.nn.one_hot(DOMAIN_LABEL_IDX, N_LABELS_ALL, dtype=jnp.float32).T
    params = {
        'w1': 0.1 * jax.random.normal(ks[3], (INST_DIM, RANK_HID), jnp.float32),
        'b1': 0.1 * jax.random.normal(ks[4], (1, RANK_HID), jnp.float32),
        'w2': 0.1 * jax.random.normal(ks[5], (RANK_HID, 1), jnp.float32),
        'b2': 0.1 * jax.random.normal(ks[6], (1, 1), jnp.float32),
        'wl': 0.1 * jax.random.normal(ks[7], (INST_DIM, N_LABELS_ALL), jnp.float32),
        'bl': 0.1 * jax.random.normal(ks[8], (1, N_LABELS_ALL), jnp.float32),
        'sel': sel,                                                  # [L, nD]
    }
    params = pack_params(params)

    out = verification_forward(claim_tokens, claim_mask, evid_tokens,
                               evid_masks, metadata_encoding, params)
    out = jax.block_until_ready(out)

    ref = reference_forward(claim_tokens, claim_mask, evid_tokens,
                            evid_masks, metadata_encoding, params)
    assert out.shape == (N_LABELS_DOM,)
    # tolerance accounts for the EUP approx reciprocal in the softmax denom
    assert jnp.allclose(out, ref, rtol=5e-3, atol=2e-4), (out, ref)
    print("KERNEL_OK")
</pallas_src>

<mosaic_0001>
module attributes {stable_mosaic.version = 11 : i64} {
  func.func @_fused_kernel(%arg0: memref<40x32xf32, #tpu.memory_space<vmem>>, %arg1: memref<5x40xf32, #tpu.memory_space<vmem>>, %arg2: memref<1x16xf32, #tpu.memory_space<vmem>>, %arg3: memref<81x144xf32, #tpu.memory_space<vmem>>, %arg4: memref<1x17xf32, #tpu.memory_space<vmem>>, %arg5: memref<8x128xf32, #tpu.memory_space<vmem>>) attributes {dimension_semantics = [], scalar_prefetch = 0 : i64, scratch_operands = 0 : i64, tpu.core_type = #tpu.core_type<tc>} {
    %c0 = arith.constant 0 : index
    %c0_0 = arith.constant 0 : index
    %0 = vector.load %arg1[%c0, %c0_0] : memref<5x40xf32, #tpu.memory_space<vmem>>, vector<5x40xf32>
    %c0_1 = arith.constant 0 : index
    %c0_2 = arith.constant 0 : index
    %1 = vector.load %arg0[%c0_1, %c0_2] : memref<40x32xf32, #tpu.memory_space<vmem>>, vector<40x32xf32>
    %cst = arith.constant dense<0.000000e+00> : vector<5x32xf32>
    %2 = tpu.matmul %0, %1, %cst {dimension_numbers = #tpu.dot_dimension_numbers<[1], [0], [0], [1], [0, 0, 1, 1], [], []>} : vector<5x40xf32>, vector<40x32xf32>, vector<5x32xf32> -> vector<5x32xf32>
    %3 = vector.extract_strided_slice %2 {offsets = [0, 0], sizes = [1, 32], strides = [1, 1]} : vector<5x32xf32> to vector<1x32xf32>
    %4 = vector.extract_strided_slice %2 {offsets = [1, 0], sizes = [4, 32], strides = [1, 1]} : vector<5x32xf32> to vector<4x32xf32>
    %c0_3 = arith.constant 0 : index
    %c0_4 = arith.constant 0 : index
    %5 = vector.load %arg3[%c0_3, %c0_4] : memref<81x144xf32, #tpu.memory_space<vmem>>, vector<32x144xf32>
    %c32 = arith.constant 32 : index
    %c0_5 = arith.constant 0 : index
    %6 = vector.load %arg3[%c32, %c0_5] : memref<81x144xf32, #tpu.memory_space<vmem>>, vector<32x144xf32>
    %c64 = arith.constant 64 : index
    %c0_6 = arith.constant 0 : index
    %7 = vector.load %arg3[%c64, %c0_6] : memref<81x144xf32, #tpu.memory_space<vmem>>, vector<16x144xf32>
    %c80 = arith.constant 80 : index
    %c0_7 = arith.constant 0 : index
    %8 = vector.load %arg3[%c80, %c0_7] : memref<81x144xf32, #tpu.memory_space<vmem>>, vector<1x144xf32>
    %cst_8 = arith.constant dense<0.000000e+00> : vector<1x144xf32>
    %9 = tpu.matmul %3, %5, %cst_8 {dimension_numbers = #tpu.dot_dimension_numbers<[1], [0], [0], [1], [0, 0, 1, 1], [], []>} : vector<1x32xf32>, vector<32x144xf32>, vector<1x144xf32> -> vector<1x144xf32>
    %c0_9 = arith.constant 0 : index
    %c0_10 = arith.constant 0 : index
    %10 = vector.load %arg2[%c0_9, %c0_10] : memref<1x16xf32, #tpu.memory_space<vmem>>, vector<1x16xf32>
    %cst_11 = arith.constant dense<0.000000e+00> : vector<1x144xf32>
    %11 = tpu.matmul %10, %7, %cst_11 {dimension_numbers = #tpu.dot_dimension_numbers<[1], [0], [0], [1], [0, 0, 1, 1], [], []>} : vector<1x16xf32>, vector<16x144xf32>, vector<1x144xf32> -> vector<1x144xf32>
    %12 = arith.addf %9, %11 : vector<1x144xf32>
    %13 = arith.addf %12, %8 : vector<1x144xf32>
    %cst_12 = arith.constant dense<0.000000e+00> : vector<4x144xf32>
    %14 = tpu.matmul %4, %6, %cst_12 {dimension_numbers = #tpu.dot_dimension_numbers<[1], [0], [0], [1], [0, 0, 1, 1], [], []>} : vector<4x32xf32>, vector<32x144xf32>, vector<4x144xf32> -> vector<4x144xf32>
    %15 = vector.broadcast %13 : vector<1x144xf32> to vector<4x144xf32>
    %16 = arith.addf %14, %15 : vector<4x144xf32>
    %17 = vector.extract_strided_slice %16 {offsets = [0, 0], sizes = [4, 128], strides = [1, 1]} : vector<4x144xf32> to vector<4x128xf32>
    %18 = vector.extract_strided_slice %16 {offsets = [0, 128], sizes = [4, 16], strides = [1, 1]} : vector<4x144xf32> to vector<4x16xf32>
    %cst_13 = arith.constant 0.000000e+00 : f32
    %19 = vector.broadcast %cst_13 : f32 to vector<4x16xf32>
    %20 = arith.maximumf %18, %19 : vector<4x16xf32>
    %c0_14 = arith.constant 0 : index
    %c0_15 = arith.constant 0 : index
    %21 = vector.load %arg4[%c0_14, %c0_15] : memref<1x17xf32, #tpu.memory_space<vmem>>, vector<1x16xf32>
    %c0_16 = arith.constant 0 : index
    %c16 = arith.constant 16 : index
    %22 = vector.load %arg4[%c0_16, %c16] : memref<1x17xf32, #tpu.memory_space<vmem>>, vector<1x1xf32>
    %23 = vector.broadcast %21 : vector<1x16xf32> to vector<4x16xf32>
    %24 = arith.mulf %20, %23 : vector<4x16xf32>
    %cst_17 = arith.constant dense<0.000000e+00> : vector<4xf32>
    %25 = vector.multi_reduction <add>, %24, %cst_17 [1] : vector<4x16xf32> to vector<4xf32>
    %26 = vector.shape_cast %25 : vector<4xf32> to vector<4x1xf32>
    %27 = vector.broadcast %22 : vector<1x1xf32> to vector<4x1xf32>
    %28 = arith.addf %26, %27 : vector<4x1xf32>
    %cst_18 = arith.constant 0.000000e+00 : f32
    %29 = vector.broadcast %cst_18 : f32 to vector<4x1xf32>
    %30 = arith.subf %29, %28 : vector<4x1xf32>
    %31 = math.exp %30 : vector<4x1xf32>
    %cst_19 = arith.constant 1.000000e+00 : f32
    %32 = vector.broadcast %cst_19 : f32 to vector<4x1xf32>
    %33 = arith.addf %32, %31 : vector<4x1xf32>
    %cst_20 = arith.constant 1.000000e+00 : f32
    %34 = vector.broadcast %cst_20 : f32 to vector<4x1xf32>
    %35 = arith.divf %34, %33 : vector<4x1xf32>
    %cst_21 = arith.constant dense<0xFF800000> : vector<4xf32>
    %36 = vector.multi_reduction <maximumf>, %17, %cst_21 [1] : vector<4x128xf32> to vector<4xf32>
    %37 = vector.shape_cast %36 : vector<4xf32> to vector<4x1xf32>
    %38 = vector.broadcast %37 : vector<4x1xf32> to vector<4x128xf32>
    %39 = arith.subf %17, %38 : vector<4x128xf32>
    %40 = math.exp %39 : vector<4x128xf32>
    %cst_22 = arith.constant dense<0.000000e+00> : vector<4xf32>
    %41 = vector.multi_reduction <add>, %40, %cst_22 [1] : vector<4x128xf32> to vector<4xf32>
    %42 = vector.shape_cast %41 : vector<4xf32> to vector<4x1xf32>
    %43 = tpu.reciprocal %42 {approx = true} : vector<4x1xf32> -> vector<4x1xf32>
    %44 = vector.broadcast %43 : vector<4x1xf32> to vector<4x128xf32>
    %45 = arith.mulf %40, %44 : vector<4x128xf32>
    %46 = vector.broadcast %35 : vector<4x1xf32> to vector<4x128xf32>
    %47 = arith.mulf %46, %45 : vector<4x128xf32>
    %cst_23 = arith.constant dense<0.000000e+00> : vector<128xf32>
    %48 = vector.multi_reduction <add>, %47, %cst_23 [0] : vector<4x128xf32> to vector<128xf32>
    %49 = vector.shape_cast %48 : vector<128xf32> to vector<1x128xf32>
    %50 = vector.shape_cast %49 : vector<1x128xf32> to vector<1x128xf32>
    %51 = vector.broadcast %50 : vector<1x128xf32> to vector<8x128xf32>
    %c0_24 = arith.constant 0 : index
    %c0_25 = arith.constant 0 : index
    %52 = vector.load %arg5[%c0_24, %c0_25] : memref<8x128xf32, #tpu.memory_space<vmem>>, vector<8x128xf32>
    tpu.vector_store %arg5[%c0_24, %c0_25], %51 {strides = array<i32>} : memref<8x128xf32, #tpu.memory_space<vmem>>, vector<8x128xf32>,
    return
  }
}

</mosaic_0001>

<llo_original>
// kernel: tpu_custom_call.1
$region0: #{tpu_custom_call.1}
  #allocation0 [shape = 'u32[]', space=smem, size = 0x4, offset = 0x4, fixed_abs, tag = 'smem constant byte address 0x4 - core index']
  #allocation1 [shape = 'u32[144,128]{1,0:T(1,128)}', space=vmem, size = 0x12000, scoped, tag = 'internal scratch']
  %s0 = inlined_call_operand.vmem [shape: f32[40,32], index: 0, kind: input, shape index: {}]
  %s1 = inlined_call_operand.vmem [shape: f32[5,40], index: 1, kind: input, shape index: {}]
  %s2 = inlined_call_operand.vmem [shape: f32[1,16], index: 2, kind: input, shape index: {}]
  %s3 = inlined_call_operand.vmem [shape: f32[81,144], index: 3, kind: input, shape index: {}]
  %s4 = inlined_call_operand.vmem [shape: f32[1,17], index: 4, kind: input, shape index: {}]
  %s5 = inlined_call_operand.hbm [shape: f32[8,128], index: 5, kind: output, shape index: {}]
  %s6 = sld [smem:[#allocation0]]
  $region30: #{tpu_custom_call.1} parent=0
    _
  %s8 = ssub.s32 1, %s6
  %s9 = scalar_select 0, %s8, %s6
  $region1: #{tpu_custom_call.1} parent=0
    #allocation2 [shape = 'u8[4096]{0}', space=vmem, size = 0x1000, scoped, tag = 'output window, operand 0, single buffered']
    #allocation3 [shape = 's32[1]{0}', space=sflag, size = 0x4, scoped, tag = 'scoped memory for tpu_custom_call.1']
    %10 = vsyncpa [#allocation3], 0
    // Predicated region
    $region2: #{tpu_custom_call.1} parent=1 // pred_check
      _
    $region3: #{tpu_custom_call.1} parent=1 // pred_check_branch
      %12 = sbr.rel (0) target = $region5
    $region4: #{tpu_custom_call.1} parent=1 // pred_region
      _
    $region5: #{tpu_custom_call.1} parent=1 // pred_fallthru
      _
    // Predicated region
    $region6: #{tpu_custom_call.1} parent=1 // pred_check
      _
    $region7: #{tpu_custom_call.1} parent=1 // pred_check_branch
      %14 = sbr.rel (0) target = $region9
    $region8: #{tpu_custom_call.1} parent=1 // pred_region
      _
    $region9: #{tpu_custom_call.1} parent=1 // pred_fallthru
      _
    // Predicated region
    $region10: #{tpu_custom_call.1} parent=1 // pred_check
      _
    $region11: #{tpu_custom_call.1} parent=1 // pred_check_branch
      %16 = sbr.rel (0) target = $region13
    $region12: #{tpu_custom_call.1} parent=1 // pred_region
      _
    $region13: #{tpu_custom_call.1} parent=1 // pred_fallthru
      _
    // Predicated region
    $region14: #{tpu_custom_call.1} parent=1 // pred_check
      _
    $region15: #{tpu_custom_call.1} parent=1 // pred_check_branch
      %18 = sbr.rel (0) target = $region17
    $region16: #{tpu_custom_call.1} parent=1 // pred_region
      _
    $region17: #{tpu_custom_call.1} parent=1 // pred_fallthru
      _
    // Predicated region
    $region18: #{tpu_custom_call.1} parent=1 // pred_check
      _
    $region19: #{tpu_custom_call.1} parent=1 // pred_check_branch
      %20 = sbr.rel (0) target = $region21
    $region20: #{tpu_custom_call.1} parent=1 // pred_region
      _
    $region21: #{tpu_custom_call.1} parent=1 // pred_fallthru
      _
    %v21 = vld [vmem:[%s1] sm:$0x1f]
    %v22 = vld [vmem:[%s0] sm:$0xff]
    %v23 = vld [vmem:[%s0 + $0x8] sm:$0xff]
    %v24 = vld [vmem:[%s0 + $0x10] sm:$0xff]
    %v25 = vld [vmem:[%s0 + $0x18] sm:$0xff]
    %v26 = vld [vmem:[%s0 + $0x20] sm:$0xff]
    %vm27 = vcmask 326656
    %v29 = vsel %vm27, %v21, 0
    %31 = vmatprep.subr.mxu0 0.0
    %32 = vmatpush1.msra.mxu0 0.0
    %33 = vmatprep.subr.mxu0 0.0
    %34 = vmatpush1.msra.mxu0 0.0
    %35 = vmatprep.subr.mxu0 0.0
    %36 = vmatpush1.msra.mxu0 0.0
    %37 = vmatprep.subr.mxu0 0.0
    %38 = vmatpush1.msra.mxu0 0.0
    %39 = vmatprep.subr.mxu0 0.0
    %40 = vmatpush1.msra.mxu0 0.0
    %41 = vmatprep.subr.mxu0 0.0
    %42 = vmatpush1.msra.mxu0 0.0
    %43 = vmatprep.subr.mxu0 0.0
    %44 = vmatpush1.msra.mxu0 0.0
    %45 = vmatprep.subr.mxu0 0.0
    %46 = vmatpush1.msra.mxu0 0.0
    %47 = vmatprep.subr.mxu0 0.0
    %48 = vmatpush1.msra.mxu0 0.0
    %49 = vmatprep.subr.mxu0 0.0
    %50 = vmatpush1.msra.mxu0 0.0
    %51 = vmatprep.subr.mxu0 0.0
    %52 = vmatpush1.msra.mxu0 0.0
    %53 = vmatprep.subr.mxu0 0.0
    %54 = vmatpush1.msra.mxu0 %v26
    %55 = vmatprep.subr.mxu0 0.0
    %56 = vmatpush1.msra.mxu0 %v25
    %57 = vmatprep.subr.mxu0 0.0
    %58 = vmatpush1.msra.mxu0 %v24
    %59 = vmatprep.subr.mxu0 0.0
    %60 = vmatpush1.msra.mxu0 %v23
    %61 = vmatprep.subr.mxu0 0.0
    %62 = vmatpush1.msra.mxu0 %v22
    %63 = vmatprep.subr.mxu0 0.0
    %64 = vmatpush2.msra.mxu0 0.0
    %65 = vmatprep.subr.mxu0 0.0
    %66 = vmatpush2.msra.mxu0 0.0
    %67 = vmatprep.subr.mxu0 0.0
    %68 = vmatpush2.msra.mxu0 0.0
    %69 = vmatprep.subr.mxu0 0.0
    %70 = vmatpush2.msra.mxu0 0.0
    %71 = vmatprep.subr.mxu0 0.0
    %72 = vmatpush2.msra.mxu0 0.0
    %73 = vmatprep.subr.mxu0 0.0
    %74 = vmatpush2.msra.mxu0 0.0
    %75 = vmatprep.subr.mxu0 0.0
    %76 = vmatpush2.msra.mxu0 0.0
    %77 = vmatprep.subr.mxu0 0.0
    %78 = vmatpush2.msra.mxu0 0.0
    %79 = vmatprep.subr.mxu0 0.0
    %80 = vmatpush2.msra.mxu0 0.0
    %81 = vmatprep.subr.mxu0 0.0
    %82 = vmatpush2.msra.mxu0 0.0
    %83 = vmatprep.subr.mxu0 0.0
    %84 = vmatpush2.msra.mxu0 0.0
    %85 = vmatprep.subr.mxu0 0.0
    %86 = vmatpush2.msra.mxu0 0.0
    %87 = vmatprep.subr.mxu0 0.0
    %88 = vmatpush2.msra.mxu0 0.0
    %89 = vmatprep.subr.mxu0 0.0
    %90 = vmatpush2.msra.mxu0 0.0
    %91 = vmatprep.subr.mxu0 0.0
    %92 = vmatpush2.msra.mxu0 0.0
    %93 = vmatprep.subr.mxu0 0.0
    %94 = vmatpush2.msra.mxu0 0.0
    %95 = vmatprep.mubr.f32.mxu0 0.0
    %96 = vmatmul.mubr.f32.gmra.mxu0 %v29
    %v97 = vpop.f32.mrf.mxu0
    %v98 = vadd.f32 0.0, %v97
    %v99 = vpop.f32.mrf.mxu0
    %100 = vdwg.mxu0
    %v101 = vld [vmem:[%s3] sm:$0xff]
    %v102 = vld [vmem:[%s3 + $0x8] sm:$0xff]
    %v103 = vld [vmem:[%s3 + $0x10] sm:$0xff]
    %v104 = vld [vmem:[%s3 + $0x18] sm:$0xff]
    %v105 = vld [vmem:[%s3 + $0x20] sm:$0xff]
    %v106 = vld [vmem:[%s3 + $0x28] sm:$0xff]
    %v107 = vld [vmem:[%s3 + $0x30] sm:$0xff]
    %v108 = vld [vmem:[%s3 + $0x38] sm:$0xff]
    %v109 = vld [vmem:[%s3 + $0x40] sm:$0xff]
    %v110 = vld [vmem:[%s3 + $0x48] sm:$0xff]
    %v111 = vld [vmem:[%s3 + $0x50] sm:$0xff]
    %v112 = vld [vmem:[%s3 + $0x58] sm:$0xff]
    %v113 = vld [vmem:[%s3 + $0x60] sm:$0xff]
    %v114 = vld [vmem:[%s3 + $0x68] sm:$0xff]
    %v115 = vld [vmem:[%s3 + $0x70] sm:$0xff]
    %v116 = vld [vmem:[%s3 + $0x78] sm:$0xff]
    %v117 = vld [vmem:[%s3 + $0x80] sm:$0xff]
    %v118 = vld [vmem:[%s3 + $0x88] sm:$0xff]
    %v119 = vld [vmem:[%s3 + $0x90] sm:$0xff]
    %v120 = vld [vmem:[%s3 + $0x98] sm:$0xff]
    %s121 = scalar_lea.vmem %s3, 160
    %v122 = vld [vmem:[%s121] ss:$8 sm:$0x3]
    %v123 = vld [vmem:[%s2] sm:$0x1]
    %vm124 = vcmask 130048
    %v126 = vsel %vm124, %v123, 0
    %128 = vmatprep.subr.mxu0 0.0
    %129 = vmatpush1.msra.mxu0 0.0
    %130 = vmatprep.subr.mxu0 0.0
    %131 = vmatpush1.msra.mxu0 0.0
    %132 = vmatprep.subr.mxu0 0.0
    %133 = vmatpush1.msra.mxu0 0.0
    %134 = vmatprep.subr.mxu0 0.0
    %135 = vmatpush1.msra.mxu0 0.0
    %136 = vmatprep.subr.mxu0 0.0
    %137 = vmatpush1.msra.mxu0 0.0
    %138 = vmatprep.subr.mxu0 0.0
    %139 = vmatpush1.msra.mxu0 0.0
    %140 = vmatprep.subr.mxu0 0.0
    %141 = vmatpush1.msra.mxu0 0.0
    %142 = vmatprep.subr.mxu0 0.0
    %143 = vmatpush1.msra.mxu0 0.0
    %144 = vmatprep.subr.mxu0 0.0
    %145 = vmatpush1.msra.mxu0 0.0
    %146 = vmatprep.subr.mxu0 0.0
    %147 = vmatpush1.msra.mxu0 0.0
    %148 = vmatprep.subr.mxu0 0.0
    %149 = vmatpush1.msra.mxu0 0.0
    %150 = vmatprep.subr.mxu0 0.0
    %151 = vmatpush1.msra.mxu0 0.0
    %152 = vmatprep.subr.mxu0 0.0
    %153 = vmatpush1.msra.mxu0 0.0
    %154 = vmatprep.subr.mxu0 0.0
    %155 = vmatpush1.msra.mxu0 0.0
    %156 = vmatprep.subr.mxu0 %v120
    %157 = vmatpush1.msra.mxu0 %v119
    %158 = vmatprep.subr.mxu0 %v118
    %159 = vmatpush1.msra.mxu0 %v117
    %160 = vmatprep.subr.mxu0 0.0
    %161 = vmatpush2.msra.mxu0 0.0
    %162 = vmatprep.subr.mxu0 0.0
    %163 = vmatpush2.msra.mxu0 0.0
    %164 = vmatprep.subr.mxu0 0.0
    %165 = vmatpush2.msra.mxu0 0.0
    %166 = vmatprep.subr.mxu0 0.0
    %167 = vmatpush2.msra.mxu0 0.0
    %168 = vmatprep.subr.mxu0 0.0
    %169 = vmatpush2.msra.mxu0 0.0
    %170 = vmatprep.subr.mxu0 0.0
    %171 = vmatpush2.msra.mxu0 0.0
    %172 = vmatprep.subr.mxu0 0.0
    %173 = vmatpush2.msra.mxu0 0.0
    %174 = vmatprep.subr.mxu0 0.0
    %175 = vmatpush2.msra.mxu0 0.0
    %176 = vmatprep.subr.mxu0 0.0
    %177 = vmatpush2.msra.mxu0 0.0
    %178 = vmatprep.subr.mxu0 0.0
    %179 = vmatpush2.msra.mxu0 0.0
    %180 = vmatprep.subr.mxu0 0.0
    %181 = vmatpush2.msra.mxu0 0.0
    %182 = vmatprep.subr.mxu0 0.0
    %183 = vmatpush2.msra.mxu0 0.0
    %184 = vmatprep.subr.mxu0 0.0
    %185 = vmatpush2.msra.mxu0 0.0
    %186 = vmatprep.subr.mxu0 0.0
    %187 = vmatpush2.msra.mxu0 0.0
    %188 = vmatprep.subr.mxu0 0.0
    %189 = vmatpush2.msra.mxu0 0.0
    %190 = vmatprep.subr.mxu0 0.0
    %191 = vmatpush2.msra.mxu0 0.0
    %192 = vmatprep.mubr.f32.mxu0 0.0
    %193 = vmatmul.mubr.f32.gmra.mxu0 %v126
    %v194 = vpop.f32.mrf.mxu0
    %v195 = vadd.f32 0.0, %v194
    %v196 = vpop.f32.mrf.mxu0
    %v197 = vadd.f32 0.0, %v196
    %198 = vdwg.mxu0
    %vm199 = vcmask 261120
    %v201 = vsel %vm199, %v98, 0
    %203 = vmatprep.subr.mxu0 0.0
    %204 = vmatpush1.msra.mxu0 0.0
    %205 = vmatprep.subr.mxu0 0.0
    %206 = vmatpush1.msra.mxu0 0.0
    %207 = vmatprep.subr.mxu0 0.0
    %208 = vmatpush1.msra.mxu0 0.0
    %209 = vmatprep.subr.mxu0 0.0
    %210 = vmatpush1.msra.mxu0 0.0
    %211 = vmatprep.subr.mxu0 0.0
    %212 = vmatpush1.msra.mxu0 0.0
    %213 = vmatprep.subr.mxu0 0.0
    %214 = vmatpush1.msra.mxu0 0.0
    %215 = vmatprep.subr.mxu0 0.0
    %216 = vmatpush1.msra.mxu0 0.0
    %217 = vmatprep.subr.mxu0 0.0
    %218 = vmatpush1.msra.mxu0 0.0
    %219 = vmatprep.subr.mxu0 0.0
    %220 = vmatpush1.msra.mxu0 0.0
    %221 = vmatprep.subr.mxu0 0.0
    %222 = vmatpush1.msra.mxu0 0.0
    %223 = vmatprep.subr.mxu0 0.0
    %224 = vmatpush1.msra.mxu0 0.0
    %225 = vmatprep.subr.mxu0 0.0
    %226 = vmatpush1.msra.mxu0 0.0
    %227 = vmatprep.subr.mxu0 %v108
    %228 = vmatpush1.msra.mxu0 %v107
    %229 = vmatprep.subr.mxu0 %v106
    %230 = vmatpush1.msra.mxu0 %v105
    %231 = vmatprep.subr.mxu0 %v104
    %232 = vmatpush1.msra.mxu0 %v103
    %233 = vmatprep.subr.mxu0 %v102
    %234 = vmatpush1.msra.mxu0 %v101
    %235 = vmatprep.subr.mxu0 0.0
    %236 = vmatpush2.msra.mxu0 0.0
    %237 = vmatprep.subr.mxu0 0.0
    %238 = vmatpush2.msra.mxu0 0.0
    %239 = vmatprep.subr.mxu0 0.0
    %240 = vmatpush2.msra.mxu0 0.0
    %241 = vmatprep.subr.mxu0 0.0
    %242 = vmatpush2.msra.mxu0 0.0
    %243 = vmatprep.subr.mxu0 0.0
    %244 = vmatpush2.msra.mxu0 0.0
    %245 = vmatprep.subr.mxu0 0.0
    %246 = vmatpush2.msra.mxu0 0.0
    %247 = vmatprep.subr.mxu0 0.0
    %248 = vmatpush2.msra.mxu0 0.0
    %249 = vmatprep.subr.mxu0 0.0
    %250 = vmatpush2.msra.mxu0 0.0
    %251 = vmatprep.subr.mxu0 0.0
    %252 = vmatpush2.msra.mxu0 0.0
    %253 = vmatprep.subr.mxu0 0.0
    %254 = vmatpush2.msra.mxu0 0.0
    %255 = vmatprep.subr.mxu0 0.0
    %256 = vmatpush2.msra.mxu0 0.0
    %257 = vmatprep.subr.mxu0 0.0
    %258 = vmatpush2.msra.mxu0 0.0
    %259 = vmatprep.subr.mxu0 0.0
    %260 = vmatpush2.msra.mxu0 0.0
    %261 = vmatprep.subr.mxu0 0.0
    %262 = vmatpush2.msra.mxu0 0.0
    %263 = vmatprep.subr.mxu0 0.0
    %264 = vmatpush2.msra.mxu0 0.0
    %265 = vmatprep.subr.mxu0 0.0
    %266 = vmatpush2.msra.mxu0 0.0
    %267 = vmatprep.mubr.f32.mxu0 0.0
    %268 = vmatmul.mubr.f32.gmra.mxu0 %v201
    %v269 = vpop.f32.mrf.mxu0
    %v270 = vadd.f32 %v195, %v269
    %v271 = vpop.f32.mrf.mxu0
    %v272 = vadd.f32 %v197, %v271
    %273 = vdwg.mxu0
    %v275 = vlaneseq
    %v276 = vshrl.u32 %v275, 7
    %v277 = vsub.s32 0, %v276
    %v278 = vrot.slane %v122, %v277
    %v279 = vlaneseq
    %v280 = vshrl.u32 %v279, 7
    %v281 = vsub.s32 1, %v280
    %v282 = vrot.slane %v122, %v281
    %v285 = vadd.f32 %v270, %v278
    %v286 = vadd.f32 %v272, %v282
    %v287 = vlaneseq
    %v288 = vshrl.u32 %v287, 7
    %v289 = vsub.s32 0, %v288
    %v290 = vrot.slane %v285, %v289
    %v291 = vlaneseq
    %v292 = vshrl.u32 %v291, 7
    %v293 = vsub.s32 0, %v292
    %v294 = vrot.slane %v286, %v293
    %v295 = vrot.slane %v98, 1
    %v296 = vsel %vm199, %v295, 0
    %298 = vmatprep.subr.mxu0 0.0
    %299 = vmatpush1.msra.mxu0 0.0
    %300 = vmatprep.subr.mxu0 0.0
    %301 = vmatpush1.msra.mxu0 0.0
    %302 = vmatprep.subr.mxu0 0.0
    %303 = vmatpush1.msra.mxu0 0.0
    %304 = vmatprep.subr.mxu0 0.0
    %305 = vmatpush1.msra.mxu0 0.0
    %306 = vmatprep.subr.mxu0 0.0
    %307 = vmatpush1.msra.mxu0 0.0
    %308 = vmatprep.subr.mxu0 0.0
    %309 = vmatpush1.msra.mxu0 0.0
    %310 = vmatprep.subr.mxu0 0.0
    %311 = vmatpush1.msra.mxu0 0.0
    %312 = vmatprep.subr.mxu0 0.0
    %313 = vmatpush1.msra.mxu0 0.0
    %314 = vmatprep.subr.mxu0 0.0
    %315 = vmatpush1.msra.mxu0 0.0
    %316 = vmatprep.subr.mxu0 0.0
    %317 = vmatpush1.msra.mxu0 0.0
    %318 = vmatprep.subr.mxu0 0.0
    %319 = vmatpush1.msra.mxu0 0.0
    %320 = vmatprep.subr.mxu0 0.0
    %321 = vmatpush1.msra.mxu0 0.0
    %322 = vmatprep.subr.mxu0 %v116
    %323 = vmatpush1.msra.mxu0 %v115
    %324 = vmatprep.subr.mxu0 %v114
    %325 = vmatpush1.msra.mxu0 %v113
    %326 = vmatprep.subr.mxu0 %v112
    %327 = vmatpush1.msra.mxu0 %v111
    %328 = vmatprep.subr.mxu0 %v110
    %329 = vmatpush1.msra.mxu0 %v109
    %330 = vmatprep.subr.mxu0 0.0
    %331 = vmatpush2.msra.mxu0 0.0
    %332 = vmatprep.subr.mxu0 0.0
    %333 = vmatpush2.msra.mxu0 0.0
    %334 = vmatprep.subr.mxu0 0.0
    %335 = vmatpush2.msra.mxu0 0.0
    %336 = vmatprep.subr.mxu0 0.0
    %337 = vmatpush2.msra.mxu0 0.0
    %338 = vmatprep.subr.mxu0 0.0
    %339 = vmatpush2.msra.mxu0 0.0
    %340 = vmatprep.subr.mxu0 0.0
    %341 = vmatpush2.msra.mxu0 0.0
    %342 = vmatprep.subr.mxu0 0.0
    %343 = vmatpush2.msra.mxu0 0.0
    %344 = vmatprep.subr.mxu0 0.0
    %345 = vmatpush2.msra.mxu0 0.0
    %346 = vmatprep.subr.mxu0 0.0
    %347 = vmatpush2.msra.mxu0 0.0
    %348 = vmatprep.subr.mxu0 0.0
    %349 = vmatpush2.msra.mxu0 0.0
    %350 = vmatprep.subr.mxu0 0.0
    %351 = vmatpush2.msra.mxu0 0.0
    %352 = vmatprep.subr.mxu0 0.0
    %353 = vmatpush2.msra.mxu0 0.0
    %354 = vmatprep.subr.mxu0 0.0
    %355 = vmatpush2.msra.mxu0 0.0
    %356 = vmatprep.subr.mxu0 0.0
    %357 = vmatpush2.msra.mxu0 0.0
    %358 = vmatprep.subr.mxu0 0.0
    %359 = vmatpush2.msra.mxu0 0.0
    %360 = vmatprep.subr.mxu0 0.0
    %361 = vmatpush2.msra.mxu0 0.0
    %362 = vmatprep.mubr.f32.mxu0 0.0
    %363 = vmatmul.mubr.f32.gmra.mxu0 %v296
    %v364 = vpop.f32.mrf.mxu0
    %v365 = vadd.f32 %v290, %v364
    %v366 = vpop.f32.mrf.mxu0
    %v367 = vadd.f32 %v294, %v366
    %368 = vdwg.mxu0
    %v369 = vmax.f32 %v367, 0.0
    %v370 = vld [vmem:[%s4] sm:$0x1]
    %v372 = vlaneseq
    %v373 = vshrl.u32 %v372, 7
    %v374 = vsub.s32 0, %v373
    %v375 = vrot.slane %v370, %v374
    %v377 = vmul.f32 %v369, %v375
    %vm378 = vcmask 125952
    %v379 = vsel %vm378, %v377, 0.0
    %380 = vadd.xlane.f32.xlu0 %v379
    %v381 = vpop.xlane.xlu0 %380
    %v382 = vadd.f32 %v381, %v375
    %v383 = vsub.f32 0.0, %v382
    %v384 = vmul.f32 %v383, 1.442695
    %v385 = vpow.pop %v384
    %v386 = vadd.f32 %v385, 1.0
    %v387 = vrcp.pop %v386
    %v388 = vmul.f32 1.0, %v387
    %vm389 = vcmask 1043456
    %v390 = vsel %vm389, %v365, -inf
    %391 = vmax.xlane.f32.xlu0 %v390
    %v392 = vpop.xlane.xlu0 %391
    %v393 = vsub.f32 %v365, %v392
    %v394 = vmul.f32 %v393, 1.442695
    %v395 = vpow.pop %v394
    %v396 = vsel %vm389, %v395, 0.0
    %397 = vadd.xlane.f32.xlu0 %v396
    %v398 = vpop.xlane.xlu0 %397
    %v399 = vrcp.pop %v398
    %v400 = vmul.f32 %v395, %v399
    %402 = vset.pattern.permute.xlu0 16
    %403 = vperm.xlu0 %402, %v388
    %v404 = vpop.permute.xlu0 %403
    %v406 = vmul.f32 %v404, %v400
    %v407 = vsel %vm389, %v406, 0.0
    %v408 = vrot.slane %v407, 4
    %v409 = vadd.f32 %v407, %v408
    %v410 = vrot.slane %v409, 2
    %v411 = vadd.f32 %v409, %v410
    %v412 = vrot.slane %v411, 1
    %v413 = vadd.f32 %v411, %v412
    %414 = vst [vmem:[#allocation2] sm:$0xff] %v413
    // Predicated region
    $region22: #{tpu_custom_call.1} parent=1 // pred_check
      _
    $region23: #{tpu_custom_call.1} parent=1 // pred_check_branch
      %416 = sbr.rel (0) target = $region25
    $region24: #{tpu_custom_call.1} parent=1 // pred_region
      %s418 = ssub.s32 128, 128
      %419 = vsyncadd [#allocation3], %s418
      %s421 = sshll.u32 [#allocation2], 4
      %s422 = int_to_ptr.vmem [resolvable:$true] %s421
      %424 = dma.vmem_to_hbm [thread:$0]  %s422, 128, %s5, [#allocation3]
    $region25: #{tpu_custom_call.1} parent=1 // pred_fallthru
      _
    // Predicated region
    $region26: #{tpu_custom_call.1} parent=1 // pred_check
      _
    $region27: #{tpu_custom_call.1} parent=1 // pred_check_branch
      %426 = sbr.rel (0) target = $region29
    $region28: #{tpu_custom_call.1} parent=1 // pred_region
      %427 = dma.done [#allocation3], 128
    $region29: #{tpu_custom_call.1} parent=1 // pred_fallthru
      _
    %428 = vsyncpa [#allocation3], 1

</llo_original>
